<compile_context>
chip_gen: v5e
topology: v5e:2x2
jax: 0.10.0
libtpu: 0.0.40
codegen_flags: <defaults>
</compile_context>

<pallas_src>
import functools

import jax
import jax.numpy as jnp
from jax.experimental import pallas as pl
from jax.experimental.pallas import tpu as pltpu


def _round_up(x, m):
    return ((x + m - 1) // m) * m


def _chip_tile_params():
    """Per-generation (target bytes per input tile, scoped-VMEM override)."""
    try:
        kind = jax.devices()[0].device_kind.lower()
    except Exception:  # pragma: no cover - conservative fallback
        kind = ""
    if "v5" in kind:
        # v5e: ~0.8 TB/s HBM, only 16 MiB default scoped VMEM -> keep 2 MiB.
        return 2 << 20, None
    if "v6" in kind:
        # v6e: ~1.4 TB/s HBM; 4 MiB/input (16 MiB with double buffering) fits
        # the 32 MiB default scoped VMEM and sits on the measured roofline.
        return 4 << 20, None
    # v7x (and unknown/newer): ~3.2 TB/s HBM per TC but only 64 MiB physical
    # VMEM -> larger tiles to amortize the ~0.35us/step overhead, with an
    # explicit scoped-VMEM raise (2 inputs x 2 buffers x 6 MiB ~= 24 MiB).
    return 6 << 20, 40 << 20


def _auto_tile_rows(dp, itemsize, target_bytes):
    """Rows per tile, sized from the lane-PADDED row width (not logical D)."""
    padded_row_bytes = _round_up(dp, 128) * itemsize
    return max(8, (target_bytes // padded_row_bytes) // 8 * 8)


def _cosine_gate_kernel(x_ref, y_ref, o_ref, *, seg_size, n_seg, eps):
    # x_ref, y_ref: (tb, dp) VMEM tiles (dp = n_seg * seg_size);
    # o_ref: (tb, n_seg); each segment is one original batch row.
    dp = x_ref.shape[1]
    xf = x_ref[...].astype(jnp.float32)
    yf = y_ref[...].astype(jnp.float32)

    # Block-diagonal "segment sum" matrix (dp, n_seg).  Doing the per-row
    # (segmented) reductions as one MXU contraction keeps them off the
    # VPU/XLU and is what makes the D<128 lane-dense repack possible.
    if n_seg == 1:
        seg = jnp.ones((dp, 1), dtype=jnp.float32)
    else:
        d_idx = jax.lax.broadcasted_iota(jnp.int32, (dp, n_seg), 0)
        s_idx = jax.lax.broadcasted_iota(jnp.int32, (dp, n_seg), 1)
        lo = s_idx * seg_size
        seg = jnp.where((d_idx >= lo) & (d_idx < lo + seg_size),
                        1.0, 0.0).astype(jnp.float32)

    dot_kwargs = dict(preferred_element_type=jnp.float32,
                      precision=jax.lax.Precision.HIGHEST)
    dot = jnp.dot(xf * yf, seg, **dot_kwargs)   # (tb, n_seg) sum x*y per row
    sx = jnp.dot(xf * xf, seg, **dot_kwargs)    # ||x||^2 per row
    sy = jnp.dot(yf * yf, seg, **dot_kwargs)    # ||y||^2 per row

    # torch F.cosine_similarity: dot / max(||x||*||y||, eps).  Clamp the
    # squared product and take one EUP rsqrt (sqrt is monotone -> identical),
    # instead of two sqrts + a divide on the VPU.
    denom2 = jnp.maximum(sx * sy, jnp.float32(eps) ** 2)
    o_ref[...] = (dot * jax.lax.rsqrt(denom2)).astype(o_ref.dtype)


def image_caption_gate(content_pooling_feature, caption_pooling_feature,
                       tile_batch=None, eps=1e-8):
    """Cosine similarity along dim=1. Inputs: (B, D), (B, D). Output: (B,)."""
    assert content_pooling_feature.shape == caption_pooling_feature.shape
    assert content_pooling_feature.ndim == 2
    B, D = content_pooling_feature.shape
    out_dtype = jnp.result_type(content_pooling_feature.dtype,
                                caption_pooling_feature.dtype)

    x = content_pooling_feature
    y = caption_pooling_feature

    # ---- Lane-dense repack for small emb_dim --------------------------------
    # For D < 128 a (tb, D) VMEM tile is lane-padded to 128 lanes (4x waste at
    # the intended D=32).  Folding k = 128//D batch rows into one 128-lane row
    # is a free row-major reshape and removes that padding entirely.
    k = 1
    if D < 128 and 128 % D == 0:
        kk = 128 // D
        if B % kk == 0 and B >= kk:
            k = kk
            x = x.reshape(B // k, k * D)
            y = y.reshape(B // k, k * D)
    Br, Dp = x.shape

    # ---- Batch-tile size -----------------------------------------------------
    itemsize = jnp.dtype(x.dtype).itemsize
    target_bytes, vmem_limit = _chip_tile_params()
    if tile_batch is not None:
        tb = max(1, int(tile_batch) // k)      # tile_batch is in original rows
    else:
        tb = _auto_tile_rows(Dp, itemsize, target_bytes)

    if Br <= 8:
        tb = Br                                # single full block (dims == array dims)
    else:
        tb = max(8, (min(tb, Br) // 8) * 8)    # (8,128) sublane alignment
        if tb >= Br:
            # Keep at least 2 grid steps: overlaps DMA with compute and lets
            # v7x's two TensorCores split the (parallel) batch grid.
            tb = _round_up((Br + 1) // 2, 8)

    # No jnp.pad (it would cost a full extra HBM read+write of both inputs):
    # the boundary block's out-of-range rows compute garbage that only lands
    # in discarded output rows.
    num_tiles = pl.cdiv(Br, tb)

    kernel = functools.partial(_cosine_gate_kernel,
                               seg_size=Dp // k, n_seg=k, eps=eps)

    compiler_kwargs = dict(dimension_semantics=("parallel",))
    if vmem_limit is not None:
        compiler_kwargs["vmem_limit_bytes"] = vmem_limit
    # TODO(synk): if xprof still shows exposed input DMA on v7x after the tile
    # enlargement, add pipeline_mode=pl.Buffered(3) to the two input BlockSpecs.

    out = pl.pallas_call(
        kernel,
        out_shape=jax.ShapeDtypeStruct((Br, k), out_dtype),
        grid_spec=pl.GridSpec(
            grid=(num_tiles,),
            in_specs=[
                pl.BlockSpec((tb, Dp), lambda i: (i, 0)),
                pl.BlockSpec((tb, Dp), lambda i: (i, 0)),
            ],
            out_specs=pl.BlockSpec((tb, k), lambda i: (i, 0)),
        ),
        compiler_params=pltpu.CompilerParams(**compiler_kwargs),
    )(x, y)

    # Row-major flatten restores original batch order (segment j of repacked
    # row r is original row r*k + j); any boundary-block garbage sits in rows
    # >= B and is sliced off here before it can reach downstream reductions.
    return out.reshape(-1)[:B]


if __name__ == "__main__":
    key = jax.random.PRNGKey(0)
    k1, k2, k3, k4, k5, k6 = jax.random.split(key, 6)

    def ref_cosine(a, b, eps=1e-8):
        a = a.astype(jnp.float32)
        b = b.astype(jnp.float32)
        dot = jnp.sum(a * b, axis=1)
        denom = jnp.maximum(
            jnp.linalg.norm(a, axis=1) * jnp.linalg.norm(b, axis=1), eps)
        return dot / denom

    # Case 1: the module's intended tiny shape (batch=4, emb_dim=32)
    # -> lane-dense repack (k=4), single block.
    c1 = jax.random.normal(k1, (4, 32), dtype=jnp.float32)
    p1 = jax.random.normal(k2, (4, 32), dtype=jnp.float32)
    s1 = image_caption_gate(c1, p1)
    jax.block_until_ready(s1)
    assert s1.shape == (4,)
    assert jnp.allclose(s1, ref_cosine(c1, p1), atol=1e-5)

    # Case 2: ragged batch (B=100, not a multiple of the repack factor)
    # -> un-repacked path, multi-step grid with a partial boundary block
    #    (no jnp.pad; garbage tail rows are sliced off).
    c2 = jax.random.normal(k3, (100, 32), dtype=jnp.float32)
    p2 = jax.random.normal(k4, (100, 32), dtype=jnp.float32)
    s2 = image_caption_gate(c2, p2, tile_batch=32)
    jax.block_until_ready(s2)
    assert s2.shape == (100,)
    assert jnp.allclose(s2, ref_cosine(c2, p2), atol=1e-5)

    # Case 3: repacked + multi-step pipelined grid (B=64 -> Br=16, 2 steps).
    c3 = jax.random.normal(k5, (64, 32), dtype=jnp.float32)
    p3 = jax.random.normal(k6, (64, 32), dtype=jnp.float32)
    s3 = image_caption_gate(c3, p3, tile_batch=32)
    jax.block_until_ready(s3)
    assert s3.shape == (64,)
    assert jnp.allclose(s3, ref_cosine(c3, p3), atol=1e-5)

    print("KERNEL_OK")
</pallas_src>

<mosaic_0001>
module attributes {stable_mosaic.version = 11 : i64} {
  func.func @_cosine_gate_kernel(%arg0: i32, %arg1: memref<1x128xf32, #tpu.memory_space<vmem>>, %arg2: memref<1x128xf32, #tpu.memory_space<vmem>>, %arg3: memref<1x4xf32, #tpu.memory_space<vmem>>) attributes {dimension_semantics = [#tpu.dimension_semantics<parallel>], iteration_bounds = array<i64: 1>, scalar_prefetch = 0 : i64, scratch_operands = 0 : i64, tpu.core_type = #tpu.core_type<tc>, window_params = [{transform_indices = @transform_0, window_bounds = array<i64: 1, 128>}, {transform_indices = @transform_1, window_bounds = array<i64: 1, 128>}, {transform_indices = @transform_2, window_bounds = array<i64: 1, 4>}]} {
    %c0 = arith.constant 0 : index
    %c0_0 = arith.constant 0 : index
    %0 = vector.load %arg1[%c0, %c0_0] : memref<1x128xf32, #tpu.memory_space<vmem>>, vector<1x128xf32>
    %c0_1 = arith.constant 0 : index
    %c0_2 = arith.constant 0 : index
    %1 = vector.load %arg2[%c0_1, %c0_2] : memref<1x128xf32, #tpu.memory_space<vmem>>, vector<1x128xf32>
    %2 = tpu.iota {dimensions = array<i32: 0>} : vector<128x4xi32>
    %3 = tpu.iota {dimensions = array<i32: 1>} : vector<128x4xi32>
    %c32_i32 = arith.constant 32 : i32
    %4 = vector.broadcast %c32_i32 : i32 to vector<128x4xi32>
    %5 = arith.muli %3, %4 : vector<128x4xi32>
    %6 = arith.cmpi sge, %2, %5 : vector<128x4xi32>
    %c32_i32_3 = arith.constant 32 : i32
    %7 = vector.broadcast %c32_i32_3 : i32 to vector<128x4xi32>
    %8 = arith.addi %5, %7 : vector<128x4xi32>
    %9 = arith.cmpi slt, %2, %8 : vector<128x4xi32>
    %10 = arith.andi %6, %9 : vector<128x4xi1>
    %cst = arith.constant 1.000000e+00 : f32
    %cst_4 = arith.constant 0.000000e+00 : f32
    %11 = vector.broadcast %cst : f32 to vector<128x4xf32>
    %12 = vector.broadcast %cst_4 : f32 to vector<128x4xf32>
    %13 = arith.select %10, %11, %12 : vector<128x4xi1>, vector<128x4xf32>
    %14 = arith.mulf %0, %1 : vector<1x128xf32>
    %cst_5 = arith.constant dense<0.000000e+00> : vector<1x4xf32>
    %15 = tpu.matmul %14, %13, %cst_5 {dimension_numbers = #tpu.dot_dimension_numbers<[1], [0], [0], [1], [0, 0, 1, 1], [], []>, precision = #tpu.contract_precision<fp32>} : vector<1x128xf32>, vector<128x4xf32>, vector<1x4xf32> -> vector<1x4xf32>
    %16 = arith.mulf %0, %0 : vector<1x128xf32>
    %cst_6 = arith.constant dense<0.000000e+00> : vector<1x4xf32>
    %17 = tpu.matmul %16, %13, %cst_6 {dimension_numbers = #tpu.dot_dimension_numbers<[1], [0], [0], [1], [0, 0, 1, 1], [], []>, precision = #tpu.contract_precision<fp32>} : vector<1x128xf32>, vector<128x4xf32>, vector<1x4xf32> -> vector<1x4xf32>
    %18 = arith.mulf %1, %1 : vector<1x128xf32>
    %cst_7 = arith.constant dense<0.000000e+00> : vector<1x4xf32>
    %19 = tpu.matmul %18, %13, %cst_7 {dimension_numbers = #tpu.dot_dimension_numbers<[1], [0], [0], [1], [0, 0, 1, 1], [], []>, precision = #tpu.contract_precision<fp32>} : vector<1x128xf32>, vector<128x4xf32>, vector<1x4xf32> -> vector<1x4xf32>
    %20 = arith.mulf %17, %19 : vector<1x4xf32>
    %cst_8 = arith.constant 9.99999993E-9 : f32
    %21 = arith.mulf %cst_8, %cst_8 : f32
    %22 = vector.broadcast %21 : f32 to vector<1x4xf32>
    %23 = arith.maximumf %20, %22 : vector<1x4xf32>
    %24 = math.rsqrt %23 : vector<1x4xf32>
    %25 = arith.mulf %15, %24 : vector<1x4xf32>
    %c0_9 = arith.constant 0 : index
    %c0_10 = arith.constant 0 : index
    %26 = vector.load %arg3[%c0_9, %c0_10] : memref<1x4xf32, #tpu.memory_space<vmem>>, vector<1x4xf32>
    tpu.vector_store %arg3[%c0_9, %c0_10], %25 {strides = array<i32>} : memref<1x4xf32, #tpu.memory_space<vmem>>, vector<1x4xf32>,
    return
  }
  func.func @transform_0(%arg0: i32) -> (i32, i32) {
    %c0_i32 = arith.constant 0 : i32
    %c0_i32_0 = arith.constant 0 : i32
    return %arg0, %c0_i32 : i32, i32
  }
  func.func @transform_1(%arg0: i32) -> (i32, i32) {
    %c0_i32 = arith.constant 0 : i32
    %c0_i32_0 = arith.constant 0 : i32
    return %arg0, %c0_i32 : i32, i32
  }
  func.func @transform_2(%arg0: i32) -> (i32, i32) {
    %c0_i32 = arith.constant 0 : i32
    %c0_i32_0 = arith.constant 0 : i32
    return %arg0, %c0_i32 : i32, i32
  }
}

</mosaic_0001>

<llo_original>
// kernel: tpu_custom_call.1
$region0: #{tpu_custom_call.1}
  #allocation0 [shape = 'u32[]', space=smem, size = 0x4, offset = 0x4, fixed_abs, tag = 'smem constant byte address 0x4 - core index']
  #allocation1 [shape = 'u32[72,128]{1,0:T(1,128)}', space=vmem, size = 0x9000, scoped, tag = 'internal scratch']
  %s0 = inlined_call_operand.hbm [shape: f32[1,128], index: 0, kind: input, shape index: {}]
  %s1 = inlined_call_operand.hbm [shape: f32[1,128], index: 1, kind: input, shape index: {}]
  %s2 = inlined_call_operand.hbm [shape: f32[1,4], index: 2, kind: output, shape index: {}]
  %s3 = sld [smem:[#allocation0]]
  $region26: #{tpu_custom_call.1} parent=0
    _
  %s5 = ssub.s32 1, %s3
  %s6 = scalar_select 0, %s5, %s3
  $region1: #{tpu_custom_call.1} parent=0
    #allocation2 [shape = 'u8[512]{0}', space=vmem, size = 0x400, scoped, tag = 'input window, operand 0, single buffered']
    #allocation3 [shape = 's32[1]{0}', space=sflag, size = 0x4, scoped, tag = 'scoped memory for tpu_custom_call.1']
    #allocation4 [shape = 's32[1]{0}', space=sflag, size = 0x4, scoped, tag = 'scoped memory for tpu_custom_call.1']
    #allocation5 [shape = 'u8[512]{0}', space=vmem, size = 0x400, scoped, tag = 'input window, operand 1, single buffered']
    #allocation6 [shape = 's32[1]{0}', space=sflag, size = 0x4, scoped, tag = 'scoped memory for tpu_custom_call.1']
    #allocation7 [shape = 'u8[512]{0}', space=vmem, size = 0x400, scoped, tag = 'output window, operand 0, single buffered']
    %7 = vsyncpa [#allocation3], 0
    %8 = vsyncpa [#allocation6], 0
    %9 = vsyncpa [#allocation4], 0
    // Predicated region
    $region2: #{tpu_custom_call.1} parent=1 // pred_check
      _
    $region3: #{tpu_custom_call.1} parent=1 // pred_check_branch
      %11 = sbr.rel (0) target = $region5
    $region4: #{tpu_custom_call.1} parent=1 // pred_region
      %13 = vsyncadd [#allocation3], 0
      %s15 = sshll.u32 %s0, 4
      %s16 = int_to_ptr.hbm [resolvable:$true] %s15
      %s17 = sshll.u32 [#allocation2], 4
      %s18 = int_to_ptr.vmem [resolvable:$true] %s17
      %20 = dma.hbm_to_vmem [thread:$0]  %s16, 16, %s18, [#allocation3]
    $region5: #{tpu_custom_call.1} parent=1 // pred_fallthru
      _
    // Predicated region
    $region6: #{tpu_custom_call.1} parent=1 // pred_check
      _
    $region7: #{tpu_custom_call.1} parent=1 // pred_check_branch
      %22 = sbr.rel (0) target = $region9
    $region8: #{tpu_custom_call.1} parent=1 // pred_region
      %24 = vsyncadd [#allocation6], 0
      %s26 = sshll.u32 %s1, 4
      %s27 = int_to_ptr.hbm [resolvable:$true] %s26
      %s28 = sshll.u32 [#allocation5], 4
      %s29 = int_to_ptr.vmem [resolvable:$true] %s28
      %31 = dma.hbm_to_vmem [thread:$0]  %s27, 16, %s29, [#allocation6]
    $region9: #{tpu_custom_call.1} parent=1 // pred_fallthru
      _
    // Predicated region
    $region10: #{tpu_custom_call.1} parent=1 // pred_check
      _
    $region11: #{tpu_custom_call.1} parent=1 // pred_check_branch
      %33 = sbr.rel (0) target = $region13
    $region12: #{tpu_custom_call.1} parent=1 // pred_region
      %35 = dma.done [#allocation3], 16
    $region13: #{tpu_custom_call.1} parent=1 // pred_fallthru
      _
    // Predicated region
    $region14: #{tpu_custom_call.1} parent=1 // pred_check
      _
    $region15: #{tpu_custom_call.1} parent=1 // pred_check_branch
      %37 = sbr.rel (0) target = $region17
    $region16: #{tpu_custom_call.1} parent=1 // pred_region
      %39 = dma.done [#allocation6], 16
    $region17: #{tpu_custom_call.1} parent=1 // pred_fallthru
      _
    %v40 = vld [vmem:[#allocation2] sm:$0x1]
    %v41 = vld [vmem:[#allocation5] sm:$0x1]
    %v42 = vlaneseq
    %v43 = vshrl.u32 %v42, 7
    %v44 = vadd.s32 %v43, 8
    %v45 = vadd.s32 %v43, 16
    %v46 = vadd.s32 %v43, 24
    %v47 = vadd.s32 %v43, 32
    %v48 = vadd.s32 %v43, 40
    %v49 = vadd.s32 %v43, 48
    %v50 = vadd.s32 %v43, 56
    %v51 = vadd.s32 %v43, 64
    %v52 = vadd.s32 %v43, 72
    %v53 = vadd.s32 %v43, 80
    %v54 = vadd.s32 %v43, 88
    %v55 = vadd.s32 %v43, 96
    %v56 = vadd.s32 %v43, 104
    %v57 = vadd.s32 %v43, 112
    %v58 = vadd.s32 %v43, 120
    %v59 = vlaneseq
    %v60 = vand.u32 %v59, 127
    %v61 = vmul.u32 %v60, 32
    %vm62 = vcmp.ge.s32.totalorder %v43, %v61
    %vm63 = vcmp.ge.s32.totalorder %v44, %v61
    %vm64 = vcmp.ge.s32.totalorder %v45, %v61
    %vm65 = vcmp.ge.s32.totalorder %v46, %v61
    %vm66 = vcmp.ge.s32.totalorder %v47, %v61
    %vm67 = vcmp.ge.s32.totalorder %v48, %v61
    %vm68 = vcmp.ge.s32.totalorder %v49, %v61
    %vm69 = vcmp.ge.s32.totalorder %v50, %v61
    %vm70 = vcmp.ge.s32.totalorder %v51, %v61
    %vm71 = vcmp.ge.s32.totalorder %v52, %v61
    %vm72 = vcmp.ge.s32.totalorder %v53, %v61
    %vm73 = vcmp.ge.s32.totalorder %v54, %v61
    %vm74 = vcmp.ge.s32.totalorder %v55, %v61
    %vm75 = vcmp.ge.s32.totalorder %v56, %v61
    %vm76 = vcmp.ge.s32.totalorder %v57, %v61
    %vm77 = vcmp.ge.s32.totalorder %v58, %v61
    %v78 = vadd.s32 %v61, 32
    %vm79 = vcmp.lt.s32.totalorder %v43, %v78
    %vm80 = vcmp.lt.s32.totalorder %v44, %v78
    %vm81 = vcmp.lt.s32.totalorder %v45, %v78
    %vm82 = vcmp.lt.s32.totalorder %v46, %v78
    %vm83 = vcmp.lt.s32.totalorder %v47, %v78
    %vm84 = vcmp.lt.s32.totalorder %v48, %v78
    %vm85 = vcmp.lt.s32.totalorder %v49, %v78
    %vm86 = vcmp.lt.s32.totalorder %v50, %v78
    %vm87 = vcmp.lt.s32.totalorder %v51, %v78
    %vm88 = vcmp.lt.s32.totalorder %v52, %v78
    %vm89 = vcmp.lt.s32.totalorder %v53, %v78
    %vm90 = vcmp.lt.s32.totalorder %v54, %v78
    %vm91 = vcmp.lt.s32.totalorder %v55, %v78
    %vm92 = vcmp.lt.s32.totalorder %v56, %v78
    %vm93 = vcmp.lt.s32.totalorder %v57, %v78
    %vm94 = vcmp.lt.s32.totalorder %v58, %v78
    %vm95 = vmand %vm62, %vm79
    %vm96 = vmand %vm63, %vm80
    %vm97 = vmand %vm64, %vm81
    %vm98 = vmand %vm65, %vm82
    %vm99 = vmand %vm66, %vm83
    %vm100 = vmand %vm67, %vm84
    %vm101 = vmand %vm68, %vm85
    %vm102 = vmand %vm69, %vm86
    %vm103 = vmand %vm70, %vm87
    %vm104 = vmand %vm71, %vm88
    %vm105 = vmand %vm72, %vm89
    %vm106 = vmand %vm73, %vm90
    %vm107 = vmand %vm74, %vm91
    %vm108 = vmand %vm75, %vm92
    %vm109 = vmand %vm76, %vm93
    %vm110 = vmand %vm77, %vm94
    %v111 = vsel %vm95, 1.0, 0.0
    %v112 = vsel %vm96, 1.0, 0.0
    %v113 = vsel %vm97, 1.0, 0.0
    %v114 = vsel %vm98, 1.0, 0.0
    %v115 = vsel %vm99, 1.0, 0.0
    %v116 = vsel %vm100, 1.0, 0.0
    %v117 = vsel %vm101, 1.0, 0.0
    %v118 = vsel %vm102, 1.0, 0.0
    %v119 = vsel %vm103, 1.0, 0.0
    %v120 = vsel %vm104, 1.0, 0.0
    %v121 = vsel %vm105, 1.0, 0.0
    %v122 = vsel %vm106, 1.0, 0.0
    %v123 = vsel %vm107, 1.0, 0.0
    %v124 = vsel %vm108, 1.0, 0.0
    %v125 = vsel %vm109, 1.0, 0.0
    %v126 = vsel %vm110, 1.0, 0.0
    %v127 = vmul.f32 %v40, %v41
    %128 = vmatpush.msra.mxu0 %v126
    %129 = vmatpush.msra.mxu0 %v125
    %130 = vmatpush.msra.mxu0 %v124
    %131 = vmatpush.msra.mxu0 %v123
    %132 = vmatpush.msra.mxu0 %v122
    %133 = vmatpush.msra.mxu0 %v121
    %134 = vmatpush.msra.mxu0 %v120
    %135 = vmatpush.msra.mxu0 %v119
    %136 = vmatpush.msra.mxu0 %v118
    %137 = vmatpush.msra.mxu0 %v117
    %138 = vmatpush.msra.mxu0 %v116
    %139 = vmatpush.msra.mxu0 %v115
    %140 = vmatpush.msra.mxu0 %v114
    %141 = vmatpush.msra.mxu0 %v113
    %142 = vmatpush.msra.mxu0 %v112
    %143 = vmatpush.msra.mxu0 %v111
    %v144 = vand.u32 %v127, 4294901760
    %v145 = vsub.f32 %v127, %v144
    %v146 = vand.u32 %v145, 4294901760
    %v147 = vsub.f32 %v145, %v146
    %v148 = vand.u32 %v147, 4294901760
    %149 = vmatmul.f32.gmra.mxu0 %v148
    %v150 = vpop.f32.mrf.mxu0
    %v151 = vadd.f32 0.0, %v150
    %152 = vdwg.mxu0
    %v153 = vsub.f32 %v126, %v126
    %v154 = vand.u32 %v153, 4294901760
    %v155 = vsub.f32 %v153, %v154
    %v156 = vand.u32 %v155, 4294901760
    %157 = vmatpush.msra.mxu0 %v156
    %v158 = vsub.f32 %v125, %v125
    %v159 = vand.u32 %v158, 4294901760
    %v160 = vsub.f32 %v158, %v159
    %v161 = vand.u32 %v160, 4294901760
    %162 = vmatpush.msra.mxu0 %v161
    %v163 = vsub.f32 %v124, %v124
    %v164 = vand.u32 %v163, 4294901760
    %v165 = vsub.f32 %v163, %v164
    %v166 = vand.u32 %v165, 4294901760
    %167 = vmatpush.msra.mxu0 %v166
    %v168 = vsub.f32 %v123, %v123
    %v169 = vand.u32 %v168, 4294901760
    %v170 = vsub.f32 %v168, %v169
    %v171 = vand.u32 %v170, 4294901760
    %172 = vmatpush.msra.mxu0 %v171
    %v173 = vsub.f32 %v122, %v122
    %v174 = vand.u32 %v173, 4294901760
    %v175 = vsub.f32 %v173, %v174
    %v176 = vand.u32 %v175, 4294901760
    %177 = vmatpush.msra.mxu0 %v176
    %v178 = vsub.f32 %v121, %v121
    %v179 = vand.u32 %v178, 4294901760
    %v180 = vsub.f32 %v178, %v179
    %v181 = vand.u32 %v180, 4294901760
    %182 = vmatpush.msra.mxu0 %v181
    %v183 = vsub.f32 %v120, %v120
    %v184 = vand.u32 %v183, 4294901760
    %v185 = vsub.f32 %v183, %v184
    %v186 = vand.u32 %v185, 4294901760
    %187 = vmatpush.msra.mxu0 %v186
    %v188 = vsub.f32 %v119, %v119
    %v189 = vand.u32 %v188, 4294901760
    %v190 = vsub.f32 %v188, %v189
    %v191 = vand.u32 %v190, 4294901760
    %192 = vmatpush.msra.mxu0 %v191
    %v193 = vsub.f32 %v118, %v118
    %v194 = vand.u32 %v193, 4294901760
    %v195 = vsub.f32 %v193, %v194
    %v196 = vand.u32 %v195, 4294901760
    %197 = vmatpush.msra.mxu0 %v196
    %v198 = vsub.f32 %v117, %v117
    %v199 = vand.u32 %v198, 4294901760
    %v200 = vsub.f32 %v198, %v199
    %v201 = vand.u32 %v200, 4294901760
    %202 = vmatpush.msra.mxu0 %v201
    %v203 = vsub.f32 %v116, %v116
    %v204 = vand.u32 %v203, 4294901760
    %v205 = vsub.f32 %v203, %v204
    %v206 = vand.u32 %v205, 4294901760
    %207 = vmatpush.msra.mxu0 %v206
    %v208 = vsub.f32 %v115, %v115
    %v209 = vand.u32 %v208, 4294901760
    %v210 = vsub.f32 %v208, %v209
    %v211 = vand.u32 %v210, 4294901760
    %212 = vmatpush.msra.mxu0 %v211
    %v213 = vsub.f32 %v114, %v114
    %v214 = vand.u32 %v213, 4294901760
    %v215 = vsub.f32 %v213, %v214
    %v216 = vand.u32 %v215, 4294901760
    %217 = vmatpush.msra.mxu0 %v216
    %v218 = vsub.f32 %v113, %v113
    %v219 = vand.u32 %v218, 4294901760
    %v220 = vsub.f32 %v218, %v219
    %v221 = vand.u32 %v220, 4294901760
    %222 = vmatpush.msra.mxu0 %v221
    %v223 = vsub.f32 %v112, %v112
    %v224 = vand.u32 %v223, 4294901760
    %v225 = vsub.f32 %v223, %v224
    %v226 = vand.u32 %v225, 4294901760
    %227 = vmatpush.msra.mxu0 %v226
    %v228 = vsub.f32 %v111, %v111
    %v229 = vand.u32 %v228, 4294901760
    %v230 = vsub.f32 %v228, %v229
    %v231 = vand.u32 %v230, 4294901760
    %232 = vmatpush.msra.mxu0 %v231
    %v233 = vand.u32 %v127, 4294901760
    %234 = vmatmul.f32.gmra.mxu0 %v233
    %v235 = vpop.f32.mrf.mxu0
    %v236 = vadd.f32 %v151, %v235
    %237 = vdwg.mxu0
    %v238 = vsub.f32 %v126, %v126
    %239 = vmatpush.msra.mxu0 %v238
    %v240 = vsub.f32 %v125, %v125
    %241 = vmatpush.msra.mxu0 %v240
    %v242 = vsub.f32 %v124, %v124
    %243 = vmatpush.msra.mxu0 %v242
    %v244 = vsub.f32 %v123, %v123
    %245 = vmatpush.msra.mxu0 %v244
    %v246 = vsub.f32 %v122, %v122
    %247 = vmatpush.msra.mxu0 %v246
    %v248 = vsub.f32 %v121, %v121
    %249 = vmatpush.msra.mxu0 %v248
    %v250 = vsub.f32 %v120, %v120
    %251 = vmatpush.msra.mxu0 %v250
    %v252 = vsub.f32 %v119, %v119
    %253 = vmatpush.msra.mxu0 %v252
    %v254 = vsub.f32 %v118, %v118
    %255 = vmatpush.msra.mxu0 %v254
    %v256 = vsub.f32 %v117, %v117
    %257 = vmatpush.msra.mxu0 %v256
    %v258 = vsub.f32 %v116, %v116
    %259 = vmatpush.msra.mxu0 %v258
    %v260 = vsub.f32 %v115, %v115
    %261 = vmatpush.msra.mxu0 %v260
    %v262 = vsub.f32 %v114, %v114
    %263 = vmatpush.msra.mxu0 %v262
    %v264 = vsub.f32 %v113, %v113
    %265 = vmatpush.msra.mxu0 %v264
    %v266 = vsub.f32 %v112, %v112
    %267 = vmatpush.msra.mxu0 %v266
    %v268 = vsub.f32 %v111, %v111
    %269 = vmatpush.msra.mxu0 %v268
    %v270 = vand.u32 %v127, 4294901760
    %v271 = vsub.f32 %v127, %v270
    %272 = vmatmul.f32.gmra.mxu0 %v271
    %v273 = vpop.f32.mrf.mxu0
    %v274 = vadd.f32 %v236, %v273
    %275 = vdwg.mxu0
    %276 = vmatpush.msra.mxu0 %v126
    %277 = vmatpush.msra.mxu0 %v125
    %278 = vmatpush.msra.mxu0 %v124
    %279 = vmatpush.msra.mxu0 %v123
    %280 = vmatpush.msra.mxu0 %v122
    %281 = vmatpush.msra.mxu0 %v121
    %282 = vmatpush.msra.mxu0 %v120
    %283 = vmatpush.msra.mxu0 %v119
    %284 = vmatpush.msra.mxu0 %v118
    %285 = vmatpush.msra.mxu0 %v117
    %286 = vmatpush.msra.mxu0 %v116
    %287 = vmatpush.msra.mxu0 %v115
    %288 = vmatpush.msra.mxu0 %v114
    %289 = vmatpush.msra.mxu0 %v113
    %290 = vmatpush.msra.mxu0 %v112
    %291 = vmatpush.msra.mxu0 %v111
    %v292 = vand.u32 %v127, 4294901760
    %v293 = vsub.f32 %v127, %v292
    %v294 = vand.u32 %v293, 4294901760
    %295 = vmatmul.f32.gmra.mxu0 %v294
    %v296 = vpop.f32.mrf.mxu0
    %v297 = vadd.f32 %v274, %v296
    %298 = vdwg.mxu0
    %v299 = vsub.f32 %v126, %v126
    %v300 = vand.u32 %v299, 4294901760
    %301 = vmatpush.msra.mxu0 %v300
    %v302 = vsub.f32 %v125, %v125
    %v303 = vand.u32 %v302, 4294901760
    %304 = vmatpush.msra.mxu0 %v303
    %v305 = vsub.f32 %v124, %v124
    %v306 = vand.u32 %v305, 4294901760
    %307 = vmatpush.msra.mxu0 %v306
    %v308 = vsub.f32 %v123, %v123
    %v309 = vand.u32 %v308, 4294901760
    %310 = vmatpush.msra.mxu0 %v309
    %v311 = vsub.f32 %v122, %v122
    %v312 = vand.u32 %v311, 4294901760
    %313 = vmatpush.msra.mxu0 %v312
    %v314 = vsub.f32 %v121, %v121
    %v315 = vand.u32 %v314, 4294901760
    %316 = vmatpush.msra.mxu0 %v315
    %v317 = vsub.f32 %v120, %v120
    %v318 = vand.u32 %v317, 4294901760
    %319 = vmatpush.msra.mxu0 %v318
    %v320 = vsub.f32 %v119, %v119
    %v321 = vand.u32 %v320, 4294901760
    %322 = vmatpush.msra.mxu0 %v321
    %v323 = vsub.f32 %v118, %v118
    %v324 = vand.u32 %v323, 4294901760
    %325 = vmatpush.msra.mxu0 %v324
    %v326 = vsub.f32 %v117, %v117
    %v327 = vand.u32 %v326, 4294901760
    %328 = vmatpush.msra.mxu0 %v327
    %v329 = vsub.f32 %v116, %v116
    %v330 = vand.u32 %v329, 4294901760
    %331 = vmatpush.msra.mxu0 %v330
    %v332 = vsub.f32 %v115, %v115
    %v333 = vand.u32 %v332, 4294901760
    %334 = vmatpush.msra.mxu0 %v333
    %v335 = vsub.f32 %v114, %v114
    %v336 = vand.u32 %v335, 4294901760
    %337 = vmatpush.msra.mxu0 %v336
    %v338 = vsub.f32 %v113, %v113
    %v339 = vand.u32 %v338, 4294901760
    %340 = vmatpush.msra.mxu0 %v339
    %v341 = vsub.f32 %v112, %v112
    %v342 = vand.u32 %v341, 4294901760
    %343 = vmatpush.msra.mxu0 %v342
    %v344 = vsub.f32 %v111, %v111
    %v345 = vand.u32 %v344, 4294901760
    %346 = vmatpush.msra.mxu0 %v345
    %v347 = vand.u32 %v127, 4294901760
    %348 = vmatmul.f32.gmra.mxu0 %v347
    %v349 = vpop.f32.mrf.mxu0
    %v350 = vadd.f32 %v297, %v349
    %351 = vdwg.mxu0
    %352 = vmatpush.msra.mxu0 %v126
    %353 = vmatpush.msra.mxu0 %v125
    %354 = vmatpush.msra.mxu0 %v124
    %355 = vmatpush.msra.mxu0 %v123
    %356 = vmatpush.msra.mxu0 %v122
    %357 = vmatpush.msra.mxu0 %v121
    %358 = vmatpush.msra.mxu0 %v120
    %359 = vmatpush.msra.mxu0 %v119
    %360 = vmatpush.msra.mxu0 %v118
    %361 = vmatpush.msra.mxu0 %v117
    %362 = vmatpush.msra.mxu0 %v116
    %363 = vmatpush.msra.mxu0 %v115
    %364 = vmatpush.msra.mxu0 %v114
    %365 = vmatpush.msra.mxu0 %v113
    %366 = vmatpush.msra.mxu0 %v112
    %367 = vmatpush.msra.mxu0 %v111
    %v368 = vand.u32 %v127, 4294901760
    %369 = vmatmul.f32.gmra.mxu0 %v368
    %v370 = vpop.f32.mrf.mxu0
    %v371 = vadd.f32 %v350, %v370
    %372 = vdwg.mxu0
    %v373 = vmul.f32 %v40, %v40
    %374 = vmatpush.msra.mxu0 %v126
    %375 = vmatpush.msra.mxu0 %v125
    %376 = vmatpush.msra.mxu0 %v124
    %377 = vmatpush.msra.mxu0 %v123
    %378 = vmatpush.msra.mxu0 %v122
    %379 = vmatpush.msra.mxu0 %v121
    %380 = vmatpush.msra.mxu0 %v120
    %381 = vmatpush.msra.mxu0 %v119
    %382 = vmatpush.msra.mxu0 %v118
    %383 = vmatpush.msra.mxu0 %v117
    %384 = vmatpush.msra.mxu0 %v116
    %385 = vmatpush.msra.mxu0 %v115
    %386 = vmatpush.msra.mxu0 %v114
    %387 = vmatpush.msra.mxu0 %v113
    %388 = vmatpush.msra.mxu0 %v112
    %389 = vmatpush.msra.mxu0 %v111
    %v390 = vand.u32 %v373, 4294901760
    %v391 = vsub.f32 %v373, %v390
    %v392 = vand.u32 %v391, 4294901760
    %v393 = vsub.f32 %v391, %v392
    %v394 = vand.u32 %v393, 4294901760
    %395 = vmatmul.f32.gmra.mxu0 %v394
    %v396 = vpop.f32.mrf.mxu0
    %v397 = vadd.f32 0.0, %v396
    %398 = vdwg.mxu0
    %v399 = vsub.f32 %v126, %v126
    %v400 = vand.u32 %v399, 4294901760
    %v401 = vsub.f32 %v399, %v400
    %v402 = vand.u32 %v401, 4294901760
    %403 = vmatpush.msra.mxu0 %v402
    %v404 = vsub.f32 %v125, %v125
    %v405 = vand.u32 %v404, 4294901760
    %v406 = vsub.f32 %v404, %v405
    %v407 = vand.u32 %v406, 4294901760
    %408 = vmatpush.msra.mxu0 %v407
    %v409 = vsub.f32 %v124, %v124
    %v410 = vand.u32 %v409, 4294901760
    %v411 = vsub.f32 %v409, %v410
    %v412 = vand.u32 %v411, 4294901760
    %413 = vmatpush.msra.mxu0 %v412
    %v414 = vsub.f32 %v123, %v123
    %v415 = vand.u32 %v414, 4294901760
    %v416 = vsub.f32 %v414, %v415
    %v417 = vand.u32 %v416, 4294901760
    %418 = vmatpush.msra.mxu0 %v417
    %v419 = vsub.f32 %v122, %v122
    %v420 = vand.u32 %v419, 4294901760
    %v421 = vsub.f32 %v419, %v420
    %v422 = vand.u32 %v421, 4294901760
    %423 = vmatpush.msra.mxu0 %v422
    %v424 = vsub.f32 %v121, %v121
    %v425 = vand.u32 %v424, 4294901760
    %v426 = vsub.f32 %v424, %v425
    %v427 = vand.u32 %v426, 4294901760
    %428 = vmatpush.msra.mxu0 %v427
    %v429 = vsub.f32 %v120, %v120
    %v430 = vand.u32 %v429, 4294901760
    %v431 = vsub.f32 %v429, %v430
    %v432 = vand.u32 %v431, 4294901760
    %433 = vmatpush.msra.mxu0 %v432
    %v434 = vsub.f32 %v119, %v119
    %v435 = vand.u32 %v434, 4294901760
    %v436 = vsub.f32 %v434, %v435
    %v437 = vand.u32 %v436, 4294901760
    %438 = vmatpush.msra.mxu0 %v437
    %v439 = vsub.f32 %v118, %v118
    %v440 = vand.u32 %v439, 4294901760
    %v441 = vsub.f32 %v439, %v440
    %v442 = vand.u32 %v441, 4294901760
    %443 = vmatpush.msra.mxu0 %v442
    %v444 = vsub.f32 %v117, %v117
    %v445 = vand.u32 %v444, 4294901760
    %v446 = vsub.f32 %v444, %v445
    %v447 = vand.u32 %v446, 4294901760
    %448 = vmatpush.msra.mxu0 %v447
    %v449 = vsub.f32 %v116, %v116
    %v450 = vand.u32 %v449, 4294901760
    %v451 = vsub.f32 %v449, %v450
    %v452 = vand.u32 %v451, 4294901760
    %453 = vmatpush.msra.mxu0 %v452
    %v454 = vsub.f32 %v115, %v115
    %v455 = vand.u32 %v454, 4294901760
    %v456 = vsub.f32 %v454, %v455
    %v457 = vand.u32 %v456, 4294901760
    %458 = vmatpush.msra.mxu0 %v457
    %v459 = vsub.f32 %v114, %v114
    %v460 = vand.u32 %v459, 4294901760
    %v461 = vsub.f32 %v459, %v460
    %v462 = vand.u32 %v461, 4294901760
    %463 = vmatpush.msra.mxu0 %v462
    %v464 = vsub.f32 %v113, %v113
    %v465 = vand.u32 %v464, 4294901760
    %v466 = vsub.f32 %v464, %v465
    %v467 = vand.u32 %v466, 4294901760
    %468 = vmatpush.msra.mxu0 %v467
    %v469 = vsub.f32 %v112, %v112
    %v470 = vand.u32 %v469, 4294901760
    %v471 = vsub.f32 %v469, %v470
    %v472 = vand.u32 %v471, 4294901760
    %473 = vmatpush.msra.mxu0 %v472
    %v474 = vsub.f32 %v111, %v111
    %v475 = vand.u32 %v474, 4294901760
    %v476 = vsub.f32 %v474, %v475
    %v477 = vand.u32 %v476, 4294901760
    %478 = vmatpush.msra.mxu0 %v477
    %v479 = vand.u32 %v373, 4294901760
    %480 = vmatmul.f32.gmra.mxu0 %v479
    %v481 = vpop.f32.mrf.mxu0
    %v482 = vadd.f32 %v397, %v481
    %483 = vdwg.mxu0
    %v484 = vsub.f32 %v126, %v126
    %485 = vmatpush.msra.mxu0 %v484
    %v486 = vsub.f32 %v125, %v125
    %487 = vmatpush.msra.mxu0 %v486
    %v488 = vsub.f32 %v124, %v124
    %489 = vmatpush.msra.mxu0 %v488
    %v490 = vsub.f32 %v123, %v123
    %491 = vmatpush.msra.mxu0 %v490
    %v492 = vsub.f32 %v122, %v122
    %493 = vmatpush.msra.mxu0 %v492
    %v494 = vsub.f32 %v121, %v121
    %495 = vmatpush.msra.mxu0 %v494
    %v496 = vsub.f32 %v120, %v120
    %497 = vmatpush.msra.mxu0 %v496
    %v498 = vsub.f32 %v119, %v119
    %499 = vmatpush.msra.mxu0 %v498
    %v500 = vsub.f32 %v118, %v118
    %501 = vmatpush.msra.mxu0 %v500
    %v502 = vsub.f32 %v117, %v117
    %503 = vmatpush.msra.mxu0 %v502
    %v504 = vsub.f32 %v116, %v116
    %505 = vmatpush.msra.mxu0 %v504
    %v506 = vsub.f32 %v115, %v115
    %507 = vmatpush.msra.mxu0 %v506
    %v508 = vsub.f32 %v114, %v114
    %509 = vmatpush.msra.mxu0 %v508
    %v510 = vsub.f32 %v113, %v113
    %511 = vmatpush.msra.mxu0 %v510
    %v512 = vsub.f32 %v112, %v112
    %513 = vmatpush.msra.mxu0 %v512
    %v514 = vsub.f32 %v111, %v111
    %515 = vmatpush.msra.mxu0 %v514
    %v516 = vand.u32 %v373, 4294901760
    %v517 = vsub.f32 %v373, %v516
    %518 = vmatmul.f32.gmra.mxu0 %v517
    %v519 = vpop.f32.mrf.mxu0
    %v520 = vadd.f32 %v482, %v519
    %521 = vdwg.mxu0
    %522 = vmatpush.msra.mxu0 %v126
    %523 = vmatpush.msra.mxu0 %v125
    %524 = vmatpush.msra.mxu0 %v124
    %525 = vmatpush.msra.mxu0 %v123
    %526 = vmatpush.msra.mxu0 %v122
    %527 = vmatpush.msra.mxu0 %v121
    %528 = vmatpush.msra.mxu0 %v120
    %529 = vmatpush.msra.mxu0 %v119
    %530 = vmatpush.msra.mxu0 %v118
    %531 = vmatpush.msra.mxu0 %v117
    %532 = vmatpush.msra.mxu0 %v116
    %533 = vmatpush.msra.mxu0 %v115
    %534 = vmatpush.msra.mxu0 %v114
    %535 = vmatpush.msra.mxu0 %v113
    %536 = vmatpush.msra.mxu0 %v112
    %537 = vmatpush.msra.mxu0 %v111
    %v538 = vand.u32 %v373, 4294901760
    %v539 = vsub.f32 %v373, %v538
    %v540 = vand.u32 %v539, 4294901760
    %541 = vmatmul.f32.gmra.mxu0 %v540
    %v542 = vpop.f32.mrf.mxu0
    %v543 = vadd.f32 %v520, %v542
    %544 = vdwg.mxu0
    %v545 = vsub.f32 %v126, %v126
    %v546 = vand.u32 %v545, 4294901760
    %547 = vmatpush.msra.mxu0 %v546
    %v548 = vsub.f32 %v125, %v125
    %v549 = vand.u32 %v548, 4294901760
    %550 = vmatpush.msra.mxu0 %v549
    %v551 = vsub.f32 %v124, %v124
    %v552 = vand.u32 %v551, 4294901760
    %553 = vmatpush.msra.mxu0 %v552
    %v554 = vsub.f32 %v123, %v123
    %v555 = vand.u32 %v554, 4294901760
    %556 = vmatpush.msra.mxu0 %v555
    %v557 = vsub.f32 %v122, %v122
    %v558 = vand.u32 %v557, 4294901760
    %559 = vmatpush.msra.mxu0 %v558
    %v560 = vsub.f32 %v121, %v121
    %v561 = vand.u32 %v560, 4294901760
    %562 = vmatpush.msra.mxu0 %v561
    %v563 = vsub.f32 %v120, %v120
    %v564 = vand.u32 %v563, 4294901760
    %565 = vmatpush.msra.mxu0 %v564
    %v566 = vsub.f32 %v119, %v119
    %v567 = vand.u32 %v566, 4294901760
    %568 = vmatpush.msra.mxu0 %v567
    %v569 = vsub.f32 %v118, %v118
    %v570 = vand.u32 %v569, 4294901760
    %571 = vmatpush.msra.mxu0 %v570
    %v572 = vsub.f32 %v117, %v117
    %v573 = vand.u32 %v572, 4294901760
    %574 = vmatpush.msra.mxu0 %v573
    %v575 = vsub.f32 %v116, %v116
    %v576 = vand.u32 %v575, 4294901760
    %577 = vmatpush.msra.mxu0 %v576
    %v578 = vsub.f32 %v115, %v115
    %v579 = vand.u32 %v578, 4294901760
    %580 = vmatpush.msra.mxu0 %v579
    %v581 = vsub.f32 %v114, %v114
    %v582 = vand.u32 %v581, 4294901760
    %583 = vmatpush.msra.mxu0 %v582
    %v584 = vsub.f32 %v113, %v113
    %v585 = vand.u32 %v584, 4294901760
    %586 = vmatpush.msra.mxu0 %v585
    %v587 = vsub.f32 %v112, %v112
    %v588 = vand.u32 %v587, 4294901760
    %589 = vmatpush.msra.mxu0 %v588
    %v590 = vsub.f32 %v111, %v111
    %v591 = vand.u32 %v590, 4294901760
    %592 = vmatpush.msra.mxu0 %v591
    %v593 = vand.u32 %v373, 4294901760
    %594 = vmatmul.f32.gmra.mxu0 %v593
    %v595 = vpop.f32.mrf.mxu0
    %v596 = vadd.f32 %v543, %v595
    %597 = vdwg.mxu0
    %598 = vmatpush.msra.mxu0 %v126
    %599 = vmatpush.msra.mxu0 %v125
    %600 = vmatpush.msra.mxu0 %v124
    %601 = vmatpush.msra.mxu0 %v123
    %602 = vmatpush.msra.mxu0 %v122
    %603 = vmatpush.msra.mxu0 %v121
    %604 = vmatpush.msra.mxu0 %v120
    %605 = vmatpush.msra.mxu0 %v119
    %606 = vmatpush.msra.mxu0 %v118
    %607 = vmatpush.msra.mxu0 %v117
    %608 = vmatpush.msra.mxu0 %v116
    %609 = vmatpush.msra.mxu0 %v115
    %610 = vmatpush.msra.mxu0 %v114
    %611 = vmatpush.msra.mxu0 %v113
    %612 = vmatpush.msra.mxu0 %v112
    %613 = vmatpush.msra.mxu0 %v111
    %v614 = vand.u32 %v373, 4294901760
    %615 = vmatmul.f32.gmra.mxu0 %v614
    %v616 = vpop.f32.mrf.mxu0
    %v617 = vadd.f32 %v596, %v616
    %618 = vdwg.mxu0
    %v619 = vmul.f32 %v41, %v41
    %620 = vmatpush.msra.mxu0 %v126
    %621 = vmatpush.msra.mxu0 %v125
    %622 = vmatpush.msra.mxu0 %v124
    %623 = vmatpush.msra.mxu0 %v123
    %624 = vmatpush.msra.mxu0 %v122
    %625 = vmatpush.msra.mxu0 %v121
    %626 = vmatpush.msra.mxu0 %v120
    %627 = vmatpush.msra.mxu0 %v119
    %628 = vmatpush.msra.mxu0 %v118
    %629 = vmatpush.msra.mxu0 %v117
    %630 = vmatpush.msra.mxu0 %v116
    %631 = vmatpush.msra.mxu0 %v115
    %632 = vmatpush.msra.mxu0 %v114
    %633 = vmatpush.msra.mxu0 %v113
    %634 = vmatpush.msra.mxu0 %v112
    %635 = vmatpush.msra.mxu0 %v111
    %v636 = vand.u32 %v619, 4294901760
    %v637 = vsub.f32 %v619, %v636
    %v638 = vand.u32 %v637, 4294901760
    %v639 = vsub.f32 %v637, %v638
    %v640 = vand.u32 %v639, 4294901760
    %641 = vmatmul.f32.gmra.mxu0 %v640
    %v642 = vpop.f32.mrf.mxu0
    %v643 = vadd.f32 0.0, %v642
    %644 = vdwg.mxu0
    %v645 = vsub.f32 %v126, %v126
    %v646 = vand.u32 %v645, 4294901760
    %v647 = vsub.f32 %v645, %v646
    %v648 = vand.u32 %v647, 4294901760
    %649 = vmatpush.msra.mxu0 %v648
    %v650 = vsub.f32 %v125, %v125
    %v651 = vand.u32 %v650, 4294901760
    %v652 = vsub.f32 %v650, %v651
    %v653 = vand.u32 %v652, 4294901760
    %654 = vmatpush.msra.mxu0 %v653
    %v655 = vsub.f32 %v124, %v124
    %v656 = vand.u32 %v655, 4294901760
    %v657 = vsub.f32 %v655, %v656
    %v658 = vand.u32 %v657, 4294901760
    %659 = vmatpush.msra.mxu0 %v658
    %v660 = vsub.f32 %v123, %v123
    %v661 = vand.u32 %v660, 4294901760
    %v662 = vsub.f32 %v660, %v661
    %v663 = vand.u32 %v662, 4294901760
    %664 = vmatpush.msra.mxu0 %v663
    %v665 = vsub.f32 %v122, %v122
    %v666 = vand.u32 %v665, 4294901760
    %v667 = vsub.f32 %v665, %v666
    %v668 = vand.u32 %v667, 4294901760
    %669 = vmatpush.msra.mxu0 %v668
    %v670 = vsub.f32 %v121, %v121
    %v671 = vand.u32 %v670, 4294901760
    %v672 = vsub.f32 %v670, %v671
    %v673 = vand.u32 %v672, 4294901760
    %674 = vmatpush.msra.mxu0 %v673
    %v675 = vsub.f32 %v120, %v120
    %v676 = vand.u32 %v675, 4294901760
    %v677 = vsub.f32 %v675, %v676
    %v678 = vand.u32 %v677, 4294901760
    %679 = vmatpush.msra.mxu0 %v678
    %v680 = vsub.f32 %v119, %v119
    %v681 = vand.u32 %v680, 4294901760
    %v682 = vsub.f32 %v680, %v681
    %v683 = vand.u32 %v682, 4294901760
    %684 = vmatpush.msra.mxu0 %v683
    %v685 = vsub.f32 %v118, %v118
    %v686 = vand.u32 %v685, 4294901760
    %v687 = vsub.f32 %v685, %v686
    %v688 = vand.u32 %v687, 4294901760
    %689 = vmatpush.msra.mxu0 %v688
    %v690 = vsub.f32 %v117, %v117
    %v691 = vand.u32 %v690, 4294901760
    %v692 = vsub.f32 %v690, %v691
    %v693 = vand.u32 %v692, 4294901760
    %694 = vmatpush.msra.mxu0 %v693
    %v695 = vsub.f32 %v116, %v116
    %v696 = vand.u32 %v695, 4294901760
    %v697 = vsub.f32 %v695, %v696
    %v698 = vand.u32 %v697, 4294901760
    %699 = vmatpush.msra.mxu0 %v698
    %v700 = vsub.f32 %v115, %v115
    %v701 = vand.u32 %v700, 4294901760
    %v702 = vsub.f32 %v700, %v701
    %v703 = vand.u32 %v702, 4294901760
    %704 = vmatpush.msra.mxu0 %v703
    %v705 = vsub.f32 %v114, %v114
    %v706 = vand.u32 %v705, 4294901760
    %v707 = vsub.f32 %v705, %v706
    %v708 = vand.u32 %v707, 4294901760
    %709 = vmatpush.msra.mxu0 %v708
    %v710 = vsub.f32 %v113, %v113
    %v711 = vand.u32 %v710, 4294901760
    %v712 = vsub.f32 %v710, %v711
    %v713 = vand.u32 %v712, 4294901760
    %714 = vmatpush.msra.mxu0 %v713
    %v715 = vsub.f32 %v112, %v112
    %v716 = vand.u32 %v715, 4294901760
    %v717 = vsub.f32 %v715, %v716
    %v718 = vand.u32 %v717, 4294901760
    %719 = vmatpush.msra.mxu0 %v718
    %v720 = vsub.f32 %v111, %v111
    %v721 = vand.u32 %v720, 4294901760
    %v722 = vsub.f32 %v720, %v721
    %v723 = vand.u32 %v722, 4294901760
    %724 = vmatpush.msra.mxu0 %v723
    %v725 = vand.u32 %v619, 4294901760
    %726 = vmatmul.f32.gmra.mxu0 %v725
    %v727 = vpop.f32.mrf.mxu0
    %v728 = vadd.f32 %v643, %v727
    %729 = vdwg.mxu0
    %v730 = vsub.f32 %v126, %v126
    %731 = vmatpush.msra.mxu0 %v730
    %v732 = vsub.f32 %v125, %v125
    %733 = vmatpush.msra.mxu0 %v732
    %v734 = vsub.f32 %v124, %v124
    %735 = vmatpush.msra.mxu0 %v734
    %v736 = vsub.f32 %v123, %v123
    %737 = vmatpush.msra.mxu0 %v736
    %v738 = vsub.f32 %v122, %v122
    %739 = vmatpush.msra.mxu0 %v738
    %v740 = vsub.f32 %v121, %v121
    %741 = vmatpush.msra.mxu0 %v740
    %v742 = vsub.f32 %v120, %v120
    %743 = vmatpush.msra.mxu0 %v742
    %v744 = vsub.f32 %v119, %v119
    %745 = vmatpush.msra.mxu0 %v744
    %v746 = vsub.f32 %v118, %v118
    %747 = vmatpush.msra.mxu0 %v746
    %v748 = vsub.f32 %v117, %v117
    %749 = vmatpush.msra.mxu0 %v748
    %v750 = vsub.f32 %v116, %v116
    %751 = vmatpush.msra.mxu0 %v750
    %v752 = vsub.f32 %v115, %v115
    %753 = vmatpush.msra.mxu0 %v752
    %v754 = vsub.f32 %v114, %v114
    %755 = vmatpush.msra.mxu0 %v754
    %v756 = vsub.f32 %v113, %v113
    %757 = vmatpush.msra.mxu0 %v756
    %v758 = vsub.f32 %v112, %v112
    %759 = vmatpush.msra.mxu0 %v758
    %v760 = vsub.f32 %v111, %v111
    %761 = vmatpush.msra.mxu0 %v760
    %v762 = vand.u32 %v619, 4294901760
    %v763 = vsub.f32 %v619, %v762
    %764 = vmatmul.f32.gmra.mxu0 %v763
    %v765 = vpop.f32.mrf.mxu0
    %v766 = vadd.f32 %v728, %v765
    %767 = vdwg.mxu0
    %768 = vmatpush.msra.mxu0 %v126
    %769 = vmatpush.msra.mxu0 %v125
    %770 = vmatpush.msra.mxu0 %v124
    %771 = vmatpush.msra.mxu0 %v123
    %772 = vmatpush.msra.mxu0 %v122
    %773 = vmatpush.msra.mxu0 %v121
    %774 = vmatpush.msra.mxu0 %v120
    %775 = vmatpush.msra.mxu0 %v119
    %776 = vmatpush.msra.mxu0 %v118
    %777 = vmatpush.msra.mxu0 %v117
    %778 = vmatpush.msra.mxu0 %v116
    %779 = vmatpush.msra.mxu0 %v115
    %780 = vmatpush.msra.mxu0 %v114
    %781 = vmatpush.msra.mxu0 %v113
    %782 = vmatpush.msra.mxu0 %v112
    %783 = vmatpush.msra.mxu0 %v111
    %v784 = vand.u32 %v619, 4294901760
    %v785 = vsub.f32 %v619, %v784
    %v786 = vand.u32 %v785, 4294901760
    %787 = vmatmul.f32.gmra.mxu0 %v786
    %v788 = vpop.f32.mrf.mxu0
    %v789 = vadd.f32 %v766, %v788
    %790 = vdwg.mxu0
    %v791 = vsub.f32 %v126, %v126
    %v792 = vand.u32 %v791, 4294901760
    %793 = vmatpush.msra.mxu0 %v792
    %v794 = vsub.f32 %v125, %v125
    %v795 = vand.u32 %v794, 4294901760
    %796 = vmatpush.msra.mxu0 %v795
    %v797 = vsub.f32 %v124, %v124
    %v798 = vand.u32 %v797, 4294901760
    %799 = vmatpush.msra.mxu0 %v798
    %v800 = vsub.f32 %v123, %v123
    %v801 = vand.u32 %v800, 4294901760
    %802 = vmatpush.msra.mxu0 %v801
    %v803 = vsub.f32 %v122, %v122
    %v804 = vand.u32 %v803, 4294901760
    %805 = vmatpush.msra.mxu0 %v804
    %v806 = vsub.f32 %v121, %v121
    %v807 = vand.u32 %v806, 4294901760
    %808 = vmatpush.msra.mxu0 %v807
    %v809 = vsub.f32 %v120, %v120
    %v810 = vand.u32 %v809, 4294901760
    %811 = vmatpush.msra.mxu0 %v810
    %v812 = vsub.f32 %v119, %v119
    %v813 = vand.u32 %v812, 4294901760
    %814 = vmatpush.msra.mxu0 %v813
    %v815 = vsub.f32 %v118, %v118
    %v816 = vand.u32 %v815, 4294901760
    %817 = vmatpush.msra.mxu0 %v816
    %v818 = vsub.f32 %v117, %v117
    %v819 = vand.u32 %v818, 4294901760
    %820 = vmatpush.msra.mxu0 %v819
    %v821 = vsub.f32 %v116, %v116
    %v822 = vand.u32 %v821, 4294901760
    %823 = vmatpush.msra.mxu0 %v822
    %v824 = vsub.f32 %v115, %v115
    %v825 = vand.u32 %v824, 4294901760
    %826 = vmatpush.msra.mxu0 %v825
    %v827 = vsub.f32 %v114, %v114
    %v828 = vand.u32 %v827, 4294901760
    %829 = vmatpush.msra.mxu0 %v828
    %v830 = vsub.f32 %v113, %v113
    %v831 = vand.u32 %v830, 4294901760
    %832 = vmatpush.msra.mxu0 %v831
    %v833 = vsub.f32 %v112, %v112
    %v834 = vand.u32 %v833, 4294901760
    %835 = vmatpush.msra.mxu0 %v834
    %v836 = vsub.f32 %v111, %v111
    %v837 = vand.u32 %v836, 4294901760
    %838 = vmatpush.msra.mxu0 %v837
    %v839 = vand.u32 %v619, 4294901760
    %840 = vmatmul.f32.gmra.mxu0 %v839
    %v841 = vpop.f32.mrf.mxu0
    %v842 = vadd.f32 %v789, %v841
    %843 = vdwg.mxu0
    %844 = vmatpush.msra.mxu0 %v126
    %845 = vmatpush.msra.mxu0 %v125
    %846 = vmatpush.msra.mxu0 %v124
    %847 = vmatpush.msra.mxu0 %v123
    %848 = vmatpush.msra.mxu0 %v122
    %849 = vmatpush.msra.mxu0 %v121
    %850 = vmatpush.msra.mxu0 %v120
    %851 = vmatpush.msra.mxu0 %v119
    %852 = vmatpush.msra.mxu0 %v118
    %853 = vmatpush.msra.mxu0 %v117
    %854 = vmatpush.msra.mxu0 %v116
    %855 = vmatpush.msra.mxu0 %v115
    %856 = vmatpush.msra.mxu0 %v114
    %857 = vmatpush.msra.mxu0 %v113
    %858 = vmatpush.msra.mxu0 %v112
    %859 = vmatpush.msra.mxu0 %v111
    %v860 = vand.u32 %v619, 4294901760
    %861 = vmatmul.f32.gmra.mxu0 %v860
    %v862 = vpop.f32.mrf.mxu0
    %v863 = vadd.f32 %v842, %v862
    %864 = vdwg.mxu0
    %v865 = vmul.f32 %v617, %v863
    %v866 = vmax.f32 %v865, 1e-16
    %v867 = vrsqrt.pop %v866
    %v868 = vmul.f32 %v867, %v866
    %v869 = vmul.f32 %v868, %v867
    %v870 = vmul.f32 0.5, %v869
    %v871 = vsub.f32 1.5, %v870
    %v872 = vmul.f32 %v867, %v871
    %vm873 = vweird.f32 %v866
    %vm874 = vweird.f32 %v867
    %vm875 = vmor %vm873, %vm874
    %v876 = vsel %vm875, %v867, %v872
    %v877 = vmul.f32 %v371, %v876
    %vm878 = vcmask 24576
    %879 = vst.msk [vmem:[#allocation7] sm:$0x1] %vm878, %v877
    // Predicated region
    $region18: #{tpu_custom_call.1} parent=1 // pred_check
      _
    $region19: #{tpu_custom_call.1} parent=1 // pred_check_branch
      %881 = sbr.rel (0) target = $region21
    $region20: #{tpu_custom_call.1} parent=1 // pred_region
      %883 = vsyncadd [#allocation4], 0
      %s885 = sshll.u32 [#allocation7], 4
      %s886 = int_to_ptr.vmem [resolvable:$true] %s885
      %s887 = sshll.u32 %s2, 4
      %s888 = int_to_ptr.hbm [resolvable:$true] %s887
      %890 = dma.vmem_to_hbm [thread:$0]  %s886, 16, %s888, [#allocation4]
    $region21: #{tpu_custom_call.1} parent=1 // pred_fallthru
      _
    // Predicated region
    $region22: #{tpu_custom_call.1} parent=1 // pred_check
      _
    $region23: #{tpu_custom_call.1} parent=1 // pred_check_branch
      %892 = sbr.rel (0) target = $region25
    $region24: #{tpu_custom_call.1} parent=1 // pred_region
      %894 = dma.done [#allocation4], 16
    $region25: #{tpu_custom_call.1} parent=1 // pred_fallthru
      _
    %895 = vsyncpa [#allocation3], 1
    %896 = vsyncpa [#allocation6], 1
    %897 = vsyncpa [#allocation4], 1

</llo_original>
